<compile_context>
chip_gen: v7x
topology: tpu7x:2x2x1
jax: 0.10.0
libtpu: 0.0.40
codegen_flags: <defaults>
</compile_context>

<pallas_src>
import numpy as np

import jax
import jax.numpy as jnp
from jax import lax
from jax.experimental import pallas as pl
from jax.experimental.pallas import tpu as pltpu


_LANE = 128      # vreg lane width (last dim)
_SUBLANE = 8     # vreg sublane count (second-last dim)

_BLOCK_BYTES_BUDGET = 2 * 1024 * 1024   # per streamed input block


# --------------------------------------------------------------------------
# Tile selection (no padding of the data; tiles divide the real extents or
# equal the full dims, with an in-kernel mask only for a ragged time tail).
# --------------------------------------------------------------------------
def _choose_h_tile(n_hidden: int, h_tile_max: int) -> int:
    if n_hidden % _LANE != 0:
        # Full hidden extent in one block (allowed: block dim == array dim).
        return n_hidden
    h = min(h_tile_max, n_hidden)
    h = max(_LANE, h - (h % _LANE))
    while n_hidden % h != 0:
        h -= _LANE
    # Best effort: >= 2 blocks along the "parallel" axis (v7x megacore).
    while (n_hidden // h) < 2 and h >= 2 * _LANE and (h % (2 * _LANE)) == 0:
        h //= 2
    return h


def _choose_t_tile(n_steps: int, h_tile: int, t_tile_max: int,
                   bytes_budget: int) -> int:
    cap = bytes_budget // max(1, 4 * h_tile)
    cap = min(cap, t_tile_max)
    cap = max(_SUBLANE, (cap // _SUBLANE) * _SUBLANE)
    if n_steps <= cap:
        return n_steps                         # single full-extent time block
    for t in range(cap, _SUBLANE - 1, -_SUBLANE):
        if n_steps % t == 0:                   # prefer an exact divisor
            return t
    return cap                                 # ragged tail, masked in-kernel


# --------------------------------------------------------------------------
# Fused sequence kernel: one grid step per (hidden block, time block).
# The membrane potential lives in the resident output block across the
# (innermost, "arbitrary") time axis.
# --------------------------------------------------------------------------
def _make_scan_kernel(n_steps: int, t_tile: int, ragged: bool):
    def kernel(decays_ref, mem0_ref, coeff_ref, inp_ref, out_ref):
        t_blk = pl.program_id(1)

        # Initialize the resident accumulator once per hidden block.
        @pl.when(t_blk == 0)
        def _():
            out_ref[...] = mem0_ref[...]

        x = inp_ref[...]                       # (t_tile, h_tile) f32
        if ragged:
            # Only the last time block can contain out-of-range rows; the
            # coefficients are already zero there, the mask just guards
            # against NaN/Inf garbage in the partially-read tail block.
            row = lax.broadcasted_iota(jnp.int32, (t_tile, 1), 0)
            valid = (row + t_blk * t_tile) < n_steps
            x = jnp.where(valid, x, 0.0)

        c = coeff_ref[...]                     # (t_tile, 1): dt * a^(k-1-i)
        contrib = jnp.sum(x * c, axis=0, keepdims=True)   # (1, h_tile)

        decay = decays_ref[t_blk]              # scalar a^k from SMEM
        out_ref[...] = decay * out_ref[...] + contrib

    return kernel


def snn_scan(mem: jax.Array, inputs: jax.Array, dt: float,
             *, h_tile_max: int = 1024, t_tile_max: int = 512,
             block_bytes_budget: int = _BLOCK_BYTES_BUDGET) -> jax.Array:
    """Run the SNNBase recurrence over a full input sequence in ONE kernel.

    mem:    (n_hidden, 1) or (n_hidden,) float32 initial membrane potential
    inputs: (n_steps, n_hidden) float32 input currents (one row per timestep)
    returns the final membrane potential, shape (n_hidden, 1)
    """
    inputs = jnp.asarray(inputs, jnp.float32)
    n_steps, n_hidden = inputs.shape
    mem_row = jnp.asarray(mem, jnp.float32).reshape(1, n_hidden)

    dt = float(dt)
    a = 1.0 - dt

    h_tile = _choose_h_tile(n_hidden, h_tile_max)
    t_tile = _choose_t_tile(n_steps, h_tile, t_tile_max, block_bytes_budget)
    num_h = n_hidden // h_tile
    num_t = pl.cdiv(n_steps, t_tile)
    ragged = (n_steps % t_tile) != 0

    # Host-side per-block coefficients (f64 -> f32), tiny arrays.
    coeff_np = np.zeros((num_t, t_tile), dtype=np.float64)
    decay_np = np.zeros((num_t,), dtype=np.float64)
    for b in range(num_t):
        k = min(t_tile, n_steps - b * t_tile)
        coeff_np[b, :k] = dt * (a ** (k - 1 - np.arange(k, dtype=np.float64)))
        decay_np[b] = a ** k
    coeff = jnp.asarray(coeff_np.reshape(num_t * t_tile, 1), jnp.float32)
    decays = jnp.asarray(decay_np, jnp.float32)

    out = pl.pallas_call(
        _make_scan_kernel(n_steps, t_tile, ragged),
        out_shape=jax.ShapeDtypeStruct((1, n_hidden), jnp.float32),
        grid=(num_h, num_t),
        in_specs=[
            pl.BlockSpec(memory_space=pltpu.MemorySpace.SMEM),         # decays
            pl.BlockSpec((1, h_tile), lambda h, t: (0, h)),            # mem0
            pl.BlockSpec((t_tile, 1), lambda h, t: (t, 0)),            # coeff col
            pl.BlockSpec((t_tile, h_tile), lambda h, t: (t, h)),       # inputs
        ],
        out_specs=pl.BlockSpec((1, h_tile), lambda h, t: (0, h)),      # resident acc
        compiler_params=pltpu.CompilerParams(
            dimension_semantics=("parallel", "arbitrary"),
            vmem_limit_bytes=32 * 1024 * 1024,
        ),
    )(decays, mem_row, coeff, inputs)

    return out[0].reshape(n_hidden, 1)


# --------------------------------------------------------------------------
# Single Euler step (module-faithful per-call path; prefer snn_scan for loops)
# --------------------------------------------------------------------------
def _make_step_kernel(a: float, dt: float):
    def kernel(mem_ref, inp_ref, out_ref):
        out_ref[...] = a * mem_ref[...] + dt * inp_ref[...]
    return kernel


def snn_step(mem_row: jax.Array, inp_row: jax.Array, dt: float) -> jax.Array:
    """One Euler step on (1, n_hidden) rows (whole arrays in VMEM)."""
    dt = float(dt)
    return pl.pallas_call(
        _make_step_kernel(1.0 - dt, dt),
        out_shape=jax.ShapeDtypeStruct(mem_row.shape, mem_row.dtype),
        in_specs=[
            pl.BlockSpec(memory_space=pltpu.MemorySpace.VMEM),
            pl.BlockSpec(memory_space=pltpu.MemorySpace.VMEM),
        ],
        out_specs=pl.BlockSpec(memory_space=pltpu.MemorySpace.VMEM),
    )(mem_row, inp_row)


# --------------------------------------------------------------------------
# Stateful wrapper mirroring the PyTorch module's interface
# --------------------------------------------------------------------------
class SNNBaseJAX:
    """Membrane state kept device-resident as a lane-dense (1, n_hidden) row;
    exposes the PyTorch-style (n_hidden, 1) view."""

    def __init__(self, n_hidden: int, dt: float, dtype=jnp.float32):
        self.n_hidden = n_hidden
        self.dt = float(dt)
        self.dtype = dtype
        self._mem_row = jnp.zeros((1, n_hidden), dtype=dtype)  # == torch.zeros((n_hidden,1))

    @property
    def mem(self) -> jax.Array:
        return self._mem_row.reshape(self.n_hidden, 1)

    def forward(self, input_: jax.Array) -> jax.Array:
        """One timestep: input_ of shape (n_hidden, 1) or (n_hidden,)."""
        inp_row = jnp.asarray(input_, dtype=self.dtype).reshape(1, self.n_hidden)
        self._mem_row = snn_step(self._mem_row, inp_row, self.dt)
        return self.mem

    def forward_sequence(self, inputs: jax.Array) -> jax.Array:
        """Fast path: all timesteps in one pallas_call. inputs: (n_steps, n_hidden)."""
        final = snn_scan(self._mem_row, inputs, self.dt)
        self._mem_row = final.reshape(1, self.n_hidden)
        return final

    # TODO(synk): SNNBase.state() returns `self.r`, which is never defined in the
    # PyTorch module (would raise AttributeError); not ported.


# --------------------------------------------------------------------------
# Demo / correctness checks
# --------------------------------------------------------------------------
def _ref_final_np(inputs_np: np.ndarray, dt: float) -> np.ndarray:
    """Step-by-step f32 reference: m = m + dt*(x - m)."""
    m = np.zeros((inputs_np.shape[1],), dtype=np.float32)
    dt32 = np.float32(dt)
    for t in range(inputs_np.shape[0]):
        m = (m + dt32 * (inputs_np[t].astype(np.float32) - m)).astype(np.float32)
    return m


if __name__ == "__main__":
    key = jax.random.PRNGKey(0)

    # --- test 1: module-sized shapes, fused scan + per-step path ------------
    n_hidden, dt, n_steps = 32, 0.1, 8
    k1, k2 = jax.random.split(key)
    inputs = jax.random.normal(k1, (n_steps, n_hidden), dtype=jnp.float32)
    ref = _ref_final_np(np.asarray(inputs), dt).reshape(n_hidden, 1)

    mem0 = jnp.zeros((n_hidden, 1), dtype=jnp.float32)
    fused = jax.block_until_ready(snn_scan(mem0, inputs, dt))

    model = SNNBaseJAX(n_hidden=n_hidden, dt=dt)
    out = None
    for t in range(n_steps):
        out = model.forward(inputs[t][:, None])
    out = jax.block_until_ready(out)

    assert fused.shape == (n_hidden, 1)
    assert out.shape == (n_hidden, 1)
    assert np.allclose(np.asarray(fused), ref, atol=1e-5, rtol=1e-5), "fused mismatch"
    assert np.allclose(np.asarray(out), ref, atol=1e-5, rtol=1e-5), "per-step mismatch"

    # --- test 2: multi-block grid with ragged time tail (2 hidden blocks) ---
    n_hidden2, n_steps2 = 256, 41
    inputs2 = jax.random.normal(k2, (n_steps2, n_hidden2), dtype=jnp.float32)
    ref2 = _ref_final_np(np.asarray(inputs2), dt).reshape(n_hidden2, 1)
    fused2 = jax.block_until_ready(
        snn_scan(jnp.zeros((n_hidden2, 1), jnp.float32), inputs2, dt,
                 t_tile_max=16))   # forces 3 time blocks, ragged tail (k=9)
    assert np.allclose(np.asarray(fused2), ref2, atol=1e-5, rtol=1e-5), "ragged mismatch"

    print("KERNEL_OK")
</pallas_src>

<mosaic_0001>
module attributes {stable_mosaic.version = 11 : i64} {
  func.func @kernel(%arg0: i32, %arg1: i32, %arg2: memref<1xf32, #tpu.memory_space<smem>>, %arg3: memref<1x32xf32, #tpu.memory_space<vmem>>, %arg4: memref<8x1xf32, #tpu.memory_space<vmem>>, %arg5: memref<8x32xf32, #tpu.memory_space<vmem>>, %arg6: memref<1x32xf32, #tpu.memory_space<vmem>>) attributes {dimension_semantics = [#tpu.dimension_semantics<parallel>, #tpu.dimension_semantics<arbitrary>], iteration_bounds = array<i64: 1, 1>, scalar_prefetch = 0 : i64, scratch_operands = 0 : i64, tpu.core_type = #tpu.core_type<tc>, window_params = [{transform_indices = @transform_0, window_bounds = array<i64: 1>}, {transform_indices = @transform_1, window_bounds = array<i64: 1, 32>}, {transform_indices = @transform_2, window_bounds = array<i64: 8, 1>}, {transform_indices = @transform_3, window_bounds = array<i64: 8, 32>}, {transform_indices = @transform_4, window_bounds = array<i64: 1, 32>}]} {
    %c0_i32 = arith.constant 0 : i32
    %0 = arith.cmpi eq, %arg1, %c0_i32 : i32
    %1 = arith.extui %0 : i1 to i32
    %c0_i32_0 = arith.constant 0 : i32
    %2 = arith.cmpi ne, %1, %c0_i32_0 : i32
    scf.if %2 {
      %c0_8 = arith.constant 0 : index
      %c0_9 = arith.constant 0 : index
      %16 = vector.load %arg3[%c0_8, %c0_9] : memref<1x32xf32, #tpu.memory_space<vmem>>, vector<1x32xf32>
      %c0_10 = arith.constant 0 : index
      %c0_11 = arith.constant 0 : index
      %17 = vector.load %arg6[%c0_10, %c0_11] : memref<1x32xf32, #tpu.memory_space<vmem>>, vector<1x32xf32>
      tpu.vector_store %arg6[%c0_10, %c0_11], %16 {strides = array<i32>} : memref<1x32xf32, #tpu.memory_space<vmem>>, vector<1x32xf32>,
    } else {
    }
    %c0 = arith.constant 0 : index
    %c0_1 = arith.constant 0 : index
    %3 = vector.load %arg5[%c0, %c0_1] : memref<8x32xf32, #tpu.memory_space<vmem>>, vector<8x32xf32>
    %c0_2 = arith.constant 0 : index
    %c0_3 = arith.constant 0 : index
    %4 = vector.load %arg4[%c0_2, %c0_3] : memref<8x1xf32, #tpu.memory_space<vmem>>, vector<8x1xf32>
    %5 = vector.broadcast %4 : vector<8x1xf32> to vector<8x32xf32>
    %6 = arith.mulf %3, %5 : vector<8x32xf32>
    %cst = arith.constant dense<0.000000e+00> : vector<32xf32>
    %7 = vector.multi_reduction <add>, %6, %cst [0] : vector<8x32xf32> to vector<32xf32>
    %8 = vector.shape_cast %7 : vector<32xf32> to vector<1x32xf32>
    %9 = arith.index_cast %arg1 : i32 to index
    %10 = memref.load %arg2[%9] : memref<1xf32, #tpu.memory_space<smem>>
    %c0_4 = arith.constant 0 : index
    %c0_5 = arith.constant 0 : index
    %11 = vector.load %arg6[%c0_4, %c0_5] : memref<1x32xf32, #tpu.memory_space<vmem>>, vector<1x32xf32>
    %12 = vector.broadcast %10 : f32 to vector<1x32xf32>
    %13 = arith.mulf %12, %11 : vector<1x32xf32>
    %14 = arith.addf %13, %8 : vector<1x32xf32>
    %c0_6 = arith.constant 0 : index
    %c0_7 = arith.constant 0 : index
    %15 = vector.load %arg6[%c0_6, %c0_7] : memref<1x32xf32, #tpu.memory_space<vmem>>, vector<1x32xf32>
    tpu.vector_store %arg6[%c0_6, %c0_7], %14 {strides = array<i32>} : memref<1x32xf32, #tpu.memory_space<vmem>>, vector<1x32xf32>,
    return
  }
  func.func @transform_0(%arg0: i32, %arg1: i32) -> i32 {
    %c0_i32 = arith.constant 0 : i32
    %c0_i32_0 = arith.constant 0 : i32
    return %c0_i32 : i32
  }
  func.func @transform_1(%arg0: i32, %arg1: i32) -> (i32, i32) {
    %c0_i32 = arith.constant 0 : i32
    %c0_i32_0 = arith.constant 0 : i32
    return %c0_i32, %arg0 : i32, i32
  }
  func.func @transform_2(%arg0: i32, %arg1: i32) -> (i32, i32) {
    %c0_i32 = arith.constant 0 : i32
    %c0_i32_0 = arith.constant 0 : i32
    return %arg1, %c0_i32 : i32, i32
  }
  func.func @transform_3(%arg0: i32, %arg1: i32) -> (i32, i32) {
    %c0_i32 = arith.constant 0 : i32
    return %arg1, %arg0 : i32, i32
  }
  func.func @transform_4(%arg0: i32, %arg1: i32) -> (i32, i32) {
    %c0_i32 = arith.constant 0 : i32
    %c0_i32_0 = arith.constant 0 : i32
    return %c0_i32, %arg0 : i32, i32
  }
}

</mosaic_0001>

<llo_original>
// kernel: tpu_custom_call.1
$region0: #{tpu_custom_call.1}
  #allocation0 [shape = 'u32[]', space=smem, size = 0x4, offset = 0x4, fixed_abs, tag = 'smem constant byte address 0x4 - core index']
  #allocation1 [shape = 'u32[144,128]{1,0:T(1,128)}', space=vmem, size = 0x12000, scoped, tag = 'internal scratch']
  #allocation2 [shape = 'f32[1]{0:T(128)S(6)}', space=smem, size = 0x200, scoped, tag = 'scoped memory for tpu_custom_call.1']
  %s0 = inlined_call_operand.<no memory space> [shape: f32[1], index: 0, kind: input, shape index: {}]
  %s1 = inlined_call_operand.vmem [shape: f32[1,32], index: 1, kind: input, shape index: {}]
  %s2 = inlined_call_operand.vmem [shape: f32[8,1], index: 2, kind: input, shape index: {}]
  %s3 = inlined_call_operand.vmem [shape: f32[8,32], index: 3, kind: input, shape index: {}]
  %s4 = inlined_call_operand.hbm [shape: f32[1,32], index: 4, kind: output, shape index: {}]
  %s5 = sld [smem:[#allocation0]]
  $region30: #{tpu_custom_call.1} parent=0
    _
  %s7 = ssub.s32 1, %s5
  %s8 = scalar_select 0, %s7, %s5
  %9 = sst [smem:[#allocation2]] %s0
  $region1: #{tpu_custom_call.1} parent=0
    #allocation3 [shape = 'u8[512]{0}', space=vmem, size = 0x400, scoped, tag = 'output window, operand 0, single buffered']
    #allocation4 [shape = 's32[1]{0}', space=sflag, size = 0x4, scoped, tag = 'scoped memory for tpu_custom_call.1']
    %10 = vsyncpa [#allocation4], 0
    // Predicated region
    $region2: #{tpu_custom_call.1} parent=1 // pred_check
      _
    $region3: #{tpu_custom_call.1} parent=1 // pred_check_branch
      %12 = sbr.rel (0) target = $region5
    $region4: #{tpu_custom_call.1} parent=1 // pred_region
      _
    $region5: #{tpu_custom_call.1} parent=1 // pred_fallthru
      _
    // Predicated region
    $region6: #{tpu_custom_call.1} parent=1 // pred_check
      _
    $region7: #{tpu_custom_call.1} parent=1 // pred_check_branch
      %14 = sbr.rel (0) target = $region9
    $region8: #{tpu_custom_call.1} parent=1 // pred_region
      _
    $region9: #{tpu_custom_call.1} parent=1 // pred_fallthru
      _
    // Predicated region
    $region10: #{tpu_custom_call.1} parent=1 // pred_check
      _
    $region11: #{tpu_custom_call.1} parent=1 // pred_check_branch
      %16 = sbr.rel (0) target = $region13
    $region12: #{tpu_custom_call.1} parent=1 // pred_region
      _
    $region13: #{tpu_custom_call.1} parent=1 // pred_fallthru
      _
    // Predicated region
    $region14: #{tpu_custom_call.1} parent=1 // pred_check
      _
    $region15: #{tpu_custom_call.1} parent=1 // pred_check_branch
      %18 = sbr.rel (0) target = $region17
    $region16: #{tpu_custom_call.1} parent=1 // pred_region
      _
    $region17: #{tpu_custom_call.1} parent=1 // pred_fallthru
      _
    %p19 = scmp.eq.s32.totalorder 0, 0
    // Predicated region
    $region18: #{tpu_custom_call.1} parent=1 // pred_check
      %p20 = pneg %p19
    $region19: #{tpu_custom_call.1} parent=1 // pred_check_branch
      %22 = sbr.rel (%p20) target = $region21
    $region20: #{tpu_custom_call.1} parent=1 // pred_region
      %v23 = vld [vmem:[%s1] sm:$0x1]
      %vm24 = vcmask 253952
      %25 = vst.msk [vmem:[#allocation3] sm:$0x1] %vm24, %v23
    $region21: #{tpu_custom_call.1} parent=1 // pred_fallthru
      _
    %v26 = vld [vmem:[%s3] sm:$0xff]
    %v27 = vld [vmem:[%s2] sm:$0xff]
    %29 = vset.pattern.permute.xlu0 0
    %30 = vperm.xlu0 %29, %v27
    %v31 = vpop.permute.xlu0 %30
    %v33 = vmul.f32 %v26, %v31
    %vm34 = vcmask 261120
    %v35 = vsel %vm34, %v33, 0.0
    %v36 = vrot.slane %v35, 4
    %v37 = vadd.f32 %v35, %v36
    %v38 = vrot.slane %v37, 2
    %v39 = vadd.f32 %v37, %v38
    %v40 = vrot.slane %v39, 1
    %v41 = vadd.f32 %v39, %v40
    %s42 = sld [smem:[#allocation2]]
    %v43 = vld [vmem:[#allocation3] sm:$0x1]
    %v44 = vstv %s42
    %v45 = vmul.f32 %v44, %v43
    %v46 = vadd.f32 %v45, %v41
    %vm47 = vcmask 253952
    %48 = vst.msk [vmem:[#allocation3] sm:$0x1] %vm47, %v46
    // Predicated region
    $region22: #{tpu_custom_call.1} parent=1 // pred_check
      _
    $region23: #{tpu_custom_call.1} parent=1 // pred_check_branch
      %50 = sbr.rel (0) target = $region25
    $region24: #{tpu_custom_call.1} parent=1 // pred_region
      %s52 = ssub.s32 16, 16
      %53 = vsyncadd [#allocation4], %s52
      %s55 = sshll.u32 [#allocation3], 4
      %s56 = int_to_ptr.vmem [resolvable:$true] %s55
      %58 = dma.vmem_to_hbm [thread:$0]  %s56, 16, %s4, [#allocation4]
    $region25: #{tpu_custom_call.1} parent=1 // pred_fallthru
      _
    // Predicated region
    $region26: #{tpu_custom_call.1} parent=1 // pred_check
      _
    $region27: #{tpu_custom_call.1} parent=1 // pred_check_branch
      %60 = sbr.rel (0) target = $region29
    $region28: #{tpu_custom_call.1} parent=1 // pred_region
      %61 = dma.done [#allocation4], 16
    $region29: #{tpu_custom_call.1} parent=1 // pred_fallthru
      _
    %62 = vsyncpa [#allocation4], 1

</llo_original>
